<compile_context>
chip_gen: v6e
topology: v6e:2x2x1
jax: 0.10.0
libtpu: 0.0.40
codegen_flags: <defaults>
</compile_context>

<pallas_src>
import functools

import jax
import jax.numpy as jnp
from jax import lax
from jax.experimental import pallas as pl
from jax.experimental.pallas import tpu as pltpu


def _senet_kernel(x_ref, w1t_ref, b1_ref, w2t_ref, b2_ref, o_ref, *,
                  inv_hw, channels_on_lanes):
    """Fused squeeze -> excitation -> scale on one batch-slab.

    Layouts (chosen by the wrapper for lane density):
      channels_on_lanes=False: x_ref/o_ref are (Nb, C, HW)  (lane axis = HW)
      channels_on_lanes=True:  x_ref/o_ref are (Nb, HW, C)  (lane axis = C)
    w1t_ref: (C, Cr)  squeeze->reduce 1x1-conv weight, pre-transposed
    b1_ref:  (1, Cr)
    w2t_ref: (Cr, C)  reduce->expand 1x1-conv weight, pre-transposed
    b2_ref:  (1, C)
    """
    x = x_ref[...]                      # stays in the input dtype (no f32 copy)
    pool_axis = 1 if channels_on_lanes else 2

    # ---- Squeeze: global average pool, accumulated in f32 ----
    pooled = jnp.sum(x, axis=pool_axis, dtype=jnp.float32) * inv_hw     # (Nb, C)

    # ---- Excitation: tiny per-image MLP (C -> C/r -> C) on the MXU ----
    w1t = w1t_ref[...].astype(jnp.float32)                              # (C, Cr)
    b1 = b1_ref[...].astype(jnp.float32)                                # (1, Cr)
    w2t = w2t_ref[...].astype(jnp.float32)                              # (Cr, C)
    b2 = b2_ref[...].astype(jnp.float32)                                # (1, C)

    h = jnp.dot(pooled, w1t, precision=lax.Precision.HIGHEST,
                preferred_element_type=jnp.float32) + b1                # (Nb, Cr)
    h = jnp.maximum(h, 0.0)
    z = jnp.dot(h, w2t, precision=lax.Precision.HIGHEST,
                preferred_element_type=jnp.float32) + b2                # (Nb, C)
    g = jax.nn.sigmoid(z).astype(x.dtype)                               # (Nb, C)

    # ---- Scale: broadcast the gate over the spatial axis, input dtype ----
    if channels_on_lanes:
        o_ref[...] = (x * g[:, None, :]).astype(o_ref.dtype)
    else:
        o_ref[...] = (x * g[:, :, None]).astype(o_ref.dtype)


def senet_forward(x_nchw, w1, b1, w2, b2, *, block_batch=None,
                  target_block_bytes=2 << 20):
    """SENet forward.

    x_nchw: (N, C, H, W); w1: (C//r, C, 1, 1); b1: (C//r,);
    w2: (C, C//r, 1, 1); b2: (C,).  Returns (N, C, H, W).
    """
    n, c, h, w = x_nchw.shape
    cr = w1.shape[0]
    hw = h * w

    # Lane-axis choice (output lane density is the biggest measured lever):
    # keep HW on lanes when it is 128-aligned (free reshape); otherwise put C
    # on lanes when C is 128-aligned (one layout pass, dense stores inside).
    channels_on_lanes = (hw % 128 != 0) and (c % 128 == 0)
    if channels_on_lanes:
        x2 = x_nchw.reshape(n, c, hw).transpose(0, 2, 1)      # (N, HW, C)
        block3 = lambda bb: (bb, hw, c)
    else:
        x2 = x_nchw.reshape(n, c, hw)                         # (N, C, HW)
        block3 = lambda bb: (bb, c, hw)

    # 1x1-conv weights: squeeze + pre-transpose for the in-kernel matmuls.
    w1t = w1.reshape(cr, c).T                                 # (C, Cr)
    b1_2 = b1.reshape(1, cr)
    w2t = w2.reshape(c, cr).T                                 # (Cr, C)
    b2_2 = b2.reshape(1, c)

    itemsize = x_nchw.dtype.itemsize
    per_image_bytes = c * hw * itemsize

    if block_batch is None:
        # ~2 MiB blocks already sit at the HBM roofline; keep >= 4 grid steps
        # when the batch allows it so each core has pipeline depth.
        bb = max(1, target_block_bytes // per_image_bytes)
        bb = min(bb, max(1, n // 4), n)
        while n % bb:                                         # largest divisor of n
            bb -= 1
        block_batch = int(bb)
    assert n % block_batch == 0, "block_batch must divide the batch size"
    grid = (n // block_batch,)

    # Input and output x slabs are both double-buffered by the pipeline.
    block_bytes = block_batch * per_image_bytes
    weight_bytes = (2 * c * cr + c + cr) * jnp.dtype(w1.dtype).itemsize
    vmem_needed = 4 * block_bytes + 2 * weight_bytes
    vmem_limit = None
    if vmem_needed > (16 << 20):   # above the most conservative (v5e) default
        vmem_limit = int(min(max(2 * vmem_needed, 32 << 20), 96 << 20))

    kernel = functools.partial(_senet_kernel, inv_hw=1.0 / float(hw),
                               channels_on_lanes=channels_on_lanes)

    flops = int(n * (2 * c * hw + 4 * c * cr))
    bytes_accessed = int(2 * n * c * hw * itemsize + weight_bytes)

    out2 = pl.pallas_call(
        kernel,
        out_shape=jax.ShapeDtypeStruct(x2.shape, x_nchw.dtype),
        grid_spec=pltpu.PrefetchScalarGridSpec(
            num_scalar_prefetch=0,
            grid=grid,
            in_specs=[
                pl.BlockSpec(block3(block_batch), lambda i: (i, 0, 0)),
                pl.BlockSpec((c, cr), lambda i: (0, 0)),
                pl.BlockSpec((1, cr), lambda i: (0, 0)),
                pl.BlockSpec((cr, c), lambda i: (0, 0)),
                pl.BlockSpec((1, c), lambda i: (0, 0)),
            ],
            out_specs=pl.BlockSpec(block3(block_batch), lambda i: (i, 0, 0)),
        ),
        compiler_params=pltpu.CompilerParams(
            dimension_semantics=("parallel",),
            vmem_limit_bytes=vmem_limit),
        cost_estimate=pl.CostEstimate(
            flops=flops, transcendentals=n * c, bytes_accessed=bytes_accessed),
    )(x2, w1t, b1_2, w2t, b2_2)

    if channels_on_lanes:
        return out2.transpose(0, 2, 1).reshape(n, c, h, w)
    return out2.reshape(n, c, h, w)


def _senet_reference(x, w1, b1, w2, b2):
    """Plain-JAX SENet reference (f32 math)."""
    c = x.shape[1]
    cr = w1.shape[0]
    xf = x.astype(jnp.float32)
    pooled = jnp.mean(xf, axis=(2, 3))                                   # (N, C)
    w1f = w1.reshape(cr, c).astype(jnp.float32)
    w2f = w2.reshape(c, cr).astype(jnp.float32)
    hh = jnp.matmul(pooled, w1f.T, precision=lax.Precision.HIGHEST)
    hh = jnp.maximum(hh + b1.astype(jnp.float32), 0.0)
    zz = jnp.matmul(hh, w2f.T, precision=lax.Precision.HIGHEST)
    g = jax.nn.sigmoid(zz + b2.astype(jnp.float32))
    return (xf * g[:, :, None, None]).astype(x.dtype)


def _make_inputs(key, n, c, r, hgt, wid, dtype):
    k_x, k_w1, k_b1, k_w2, k_b2 = jax.random.split(key, 5)
    cr = c // r
    x = jax.random.normal(k_x, (n, c, hgt, wid), dtype=jnp.float32).astype(dtype)
    w1 = (jax.random.normal(k_w1, (cr, c, 1, 1), jnp.float32) * 0.5).astype(dtype)
    b1 = (jax.random.normal(k_b1, (cr,), jnp.float32) * 0.1).astype(dtype)
    w2 = (jax.random.normal(k_w2, (c, cr, 1, 1), jnp.float32) * 0.5).astype(dtype)
    b2 = (jax.random.normal(k_b2, (c,), jnp.float32) * 0.1).astype(dtype)
    return x, w1, b1, w2, b2


if __name__ == "__main__":
    key = jax.random.PRNGKey(0)
    k0, k1, k2 = jax.random.split(key, 3)

    # 1) Primary small test: HW = 256 on lanes, f32  (N=2, C=8, r=4 -> Cr=2).
    x, w1, b1, w2, b2 = _make_inputs(k0, 2, 8, 4, 16, 16, jnp.float32)
    out = jax.block_until_ready(senet_forward(x, w1, b1, w2, b2))
    ref = _senet_reference(x, w1, b1, w2, b2)
    assert out.shape == x.shape
    assert jnp.allclose(out, ref, atol=1e-5, rtol=1e-5)

    # 2) Channels-on-lanes path: HW = 49 < 128, C = 128 (7x7 SENet stage), f32.
    x, w1, b1, w2, b2 = _make_inputs(k1, 2, 128, 4, 7, 7, jnp.float32)
    out = jax.block_until_ready(senet_forward(x, w1, b1, w2, b2))
    ref = _senet_reference(x, w1, b1, w2, b2)
    assert jnp.allclose(out, ref, atol=1e-4, rtol=1e-4)

    # 3) bf16 input: gate cast to bf16, no f32 copy of x inside the kernel.
    x, w1, b1, w2, b2 = _make_inputs(k2, 2, 8, 4, 16, 16, jnp.bfloat16)
    out = jax.block_until_ready(senet_forward(x, w1, b1, w2, b2))
    ref = _senet_reference(x, w1, b1, w2, b2)
    assert jnp.allclose(out.astype(jnp.float32), ref.astype(jnp.float32),
                        atol=5e-2, rtol=5e-2)

    print("KERNEL_OK")
</pallas_src>

<mosaic_0001>
module attributes {stable_mosaic.version = 11 : i64} {
  func.func @_senet_kernel(%arg0: i32, %arg1: memref<1x8x256xf32, #tpu.memory_space<vmem>>, %arg2: memref<8x2xf32, #tpu.memory_space<vmem>>, %arg3: memref<1x2xf32, #tpu.memory_space<vmem>>, %arg4: memref<2x8xf32, #tpu.memory_space<vmem>>, %arg5: memref<1x8xf32, #tpu.memory_space<vmem>>, %arg6: memref<1x8x256xf32, #tpu.memory_space<vmem>>) attributes {dimension_semantics = [#tpu.dimension_semantics<parallel>], iteration_bounds = array<i64: 2>, scalar_prefetch = 0 : i64, scratch_operands = 0 : i64, tpu.core_type = #tpu.core_type<tc>, window_params = [{transform_indices = @transform_0, window_bounds = array<i64: 1, 8, 256>}, {pipeline_mode = #tpu.pipeline_mode<synchronous>, transform_indices = @transform_1, window_bounds = array<i64: 8, 2>}, {pipeline_mode = #tpu.pipeline_mode<synchronous>, transform_indices = @transform_2, window_bounds = array<i64: 1, 2>}, {pipeline_mode = #tpu.pipeline_mode<synchronous>, transform_indices = @transform_3, window_bounds = array<i64: 2, 8>}, {pipeline_mode = #tpu.pipeline_mode<synchronous>, transform_indices = @transform_4, window_bounds = array<i64: 1, 8>}, {transform_indices = @transform_5, window_bounds = array<i64: 1, 8, 256>}]} {
    %c0 = arith.constant 0 : index
    %c0_0 = arith.constant 0 : index
    %c0_1 = arith.constant 0 : index
    %0 = vector.load %arg1[%c0, %c0_0, %c0_1] : memref<1x8x256xf32, #tpu.memory_space<vmem>>, vector<1x8x256xf32>
    %cst = arith.constant dense<0.000000e+00> : vector<1x8xf32>
    %1 = vector.multi_reduction <add>, %0, %cst [2] : vector<1x8x256xf32> to vector<1x8xf32>
    %cst_2 = arith.constant 3.906250e-03 : f32
    %2 = vector.broadcast %cst_2 : f32 to vector<1x8xf32>
    %3 = arith.mulf %1, %2 : vector<1x8xf32>
    %c0_3 = arith.constant 0 : index
    %c0_4 = arith.constant 0 : index
    %4 = vector.load %arg2[%c0_3, %c0_4] : memref<8x2xf32, #tpu.memory_space<vmem>>, vector<8x2xf32>
    %c0_5 = arith.constant 0 : index
    %c0_6 = arith.constant 0 : index
    %5 = vector.load %arg3[%c0_5, %c0_6] : memref<1x2xf32, #tpu.memory_space<vmem>>, vector<1x2xf32>
    %c0_7 = arith.constant 0 : index
    %c0_8 = arith.constant 0 : index
    %6 = vector.load %arg4[%c0_7, %c0_8] : memref<2x8xf32, #tpu.memory_space<vmem>>, vector<2x8xf32>
    %c0_9 = arith.constant 0 : index
    %c0_10 = arith.constant 0 : index
    %7 = vector.load %arg5[%c0_9, %c0_10] : memref<1x8xf32, #tpu.memory_space<vmem>>, vector<1x8xf32>
    %cst_11 = arith.constant dense<0.000000e+00> : vector<1x2xf32>
    %8 = tpu.matmul %3, %4, %cst_11 {dimension_numbers = #tpu.dot_dimension_numbers<[1], [0], [0], [1], [0, 0, 1, 1], [], []>, precision = #tpu.contract_precision<fp32>} : vector<1x8xf32>, vector<8x2xf32>, vector<1x2xf32> -> vector<1x2xf32>
    %9 = arith.addf %8, %5 : vector<1x2xf32>
    %cst_12 = arith.constant 0.000000e+00 : f32
    %10 = vector.broadcast %cst_12 : f32 to vector<1x2xf32>
    %11 = arith.maximumf %9, %10 : vector<1x2xf32>
    %cst_13 = arith.constant dense<0.000000e+00> : vector<1x8xf32>
    %12 = tpu.matmul %11, %6, %cst_13 {dimension_numbers = #tpu.dot_dimension_numbers<[1], [0], [0], [1], [0, 0, 1, 1], [], []>, precision = #tpu.contract_precision<fp32>} : vector<1x2xf32>, vector<2x8xf32>, vector<1x8xf32> -> vector<1x8xf32>
    %13 = arith.addf %12, %7 : vector<1x8xf32>
    %14 = arith.negf %13 : vector<1x8xf32>
    %15 = math.exp %14 : vector<1x8xf32>
    %cst_14 = arith.constant 1.000000e+00 : f32
    %16 = vector.broadcast %cst_14 : f32 to vector<1x8xf32>
    %17 = arith.addf %16, %15 : vector<1x8xf32>
    %18 = arith.divf %16, %17 : vector<1x8xf32>
    %19 = vector.shape_cast %18 : vector<1x8xf32> to vector<1x8x1xf32>
    %20 = vector.broadcast %19 : vector<1x8x1xf32> to vector<1x8x256xf32>
    %21 = arith.mulf %0, %20 : vector<1x8x256xf32>
    %c0_15 = arith.constant 0 : index
    %c0_16 = arith.constant 0 : index
    %c0_17 = arith.constant 0 : index
    %22 = vector.load %arg6[%c0_15, %c0_16, %c0_17] : memref<1x8x256xf32, #tpu.memory_space<vmem>>, vector<1x8x256xf32>
    tpu.vector_store %arg6[%c0_15, %c0_16, %c0_17], %21 {strides = array<i32>} : memref<1x8x256xf32, #tpu.memory_space<vmem>>, vector<1x8x256xf32>,
    return
  }
  func.func @transform_0(%arg0: i32) -> (i32, i32, i32) {
    %c0_i32 = arith.constant 0 : i32
    %c0_i32_0 = arith.constant 0 : i32
    %c0_i32_1 = arith.constant 0 : i32
    return %arg0, %c0_i32, %c0_i32_0 : i32, i32, i32
  }
  func.func @transform_1(%arg0: i32) -> (i32, i32) {
    %c0_i32 = arith.constant 0 : i32
    %c0_i32_0 = arith.constant 0 : i32
    %c0_i32_1 = arith.constant 0 : i32
    return %c0_i32, %c0_i32_0 : i32, i32
  }
  func.func @transform_2(%arg0: i32) -> (i32, i32) {
    %c0_i32 = arith.constant 0 : i32
    %c0_i32_0 = arith.constant 0 : i32
    %c0_i32_1 = arith.constant 0 : i32
    return %c0_i32, %c0_i32_0 : i32, i32
  }
  func.func @transform_3(%arg0: i32) -> (i32, i32) {
    %c0_i32 = arith.constant 0 : i32
    %c0_i32_0 = arith.constant 0 : i32
    %c0_i32_1 = arith.constant 0 : i32
    return %c0_i32, %c0_i32_0 : i32, i32
  }
  func.func @transform_4(%arg0: i32) -> (i32, i32) {
    %c0_i32 = arith.constant 0 : i32
    %c0_i32_0 = arith.constant 0 : i32
    %c0_i32_1 = arith.constant 0 : i32
    return %c0_i32, %c0_i32_0 : i32, i32
  }
  func.func @transform_5(%arg0: i32) -> (i32, i32, i32) {
    %c0_i32 = arith.constant 0 : i32
    %c0_i32_0 = arith.constant 0 : i32
    %c0_i32_1 = arith.constant 0 : i32
    return %arg0, %c0_i32, %c0_i32_0 : i32, i32, i32
  }
}

</mosaic_0001>

<llo_original>
// kernel: tpu_custom_call.1
$region0: #{tpu_custom_call.1}
  #allocation0 [shape = 'u32[]', space=smem, size = 0x4, offset = 0x4, fixed_abs, tag = 'smem constant byte address 0x4 - core index']
  #allocation1 [shape = 'u32[144,128]{1,0:T(1,128)}', space=vmem, size = 0x12000, scoped, tag = 'internal scratch']
  %s0 = inlined_call_operand.hbm [shape: f32[2,8,256], index: 0, kind: input, shape index: {}]
  %s1 = inlined_call_operand.vmem [shape: f32[8,2], index: 1, kind: input, shape index: {}]
  %s2 = inlined_call_operand.vmem [shape: f32[1,2], index: 2, kind: input, shape index: {}]
  %s3 = inlined_call_operand.vmem [shape: f32[2,8], index: 3, kind: input, shape index: {}]
  %s4 = inlined_call_operand.vmem [shape: f32[1,8], index: 4, kind: input, shape index: {}]
  %s5 = inlined_call_operand.hbm [shape: f32[2,8,256], index: 5, kind: output, shape index: {}]
  %s6 = sld [smem:[#allocation0]]
  $region57: #{tpu_custom_call.1} parent=0
    _
  %s8 = ssub.s32 1, %s6
  %s9 = scalar_select 0, %s8, %s6
  $region1: #{tpu_custom_call.1} parent=0
    #allocation2 [shape = 'u8[16384]{0}', space=vmem, size = 0x4000, scoped, tag = 'input window, operand 0']
    #allocation3 [shape = 's32[2]{0}', space=sflag, size = 0x8, scoped, tag = 'scoped memory for tpu_custom_call.1']
    #allocation4 [shape = 's32[2]{0}', space=sflag, size = 0x8, scoped, tag = 'scoped memory for tpu_custom_call.1']
    #allocation5 [shape = 'u8[16384]{0}', space=vmem, size = 0x4000, scoped, tag = 'output window, operand 0']
    %10 = vsyncpa [#allocation3], 0
    %s11 = scalar_lea.sflag [#allocation3], 1
    %12 = vsyncpa %s11, 0
    %13 = vsyncpa [#allocation4], 0
    %s14 = scalar_lea.sflag [#allocation4], 1
    %15 = vsyncpa %s14, 0
    loop: start=0, step=1, limit=4
    $region2: #{tpu_custom_call.1} parent=1 // loop_pre_header
      _
    $region3: #{tpu_custom_call.1} parent=1 // loop_header
      %s17 = sphi 0, %s21
      %p18 = scmp.ge.s32.totalorder %s17, 4
      %s27 = sphi 0, %s29
      %s30 = sphi 0, %s27
      %s31 = sphi 0, %s30
      %s47 = sphi 0, %s31
      %s51 = sphi 0, %s51
      %s53 = sphi 0, %s51
      %s54 = sphi 0, %s53
      %s68 = sphi 0, %s54
      %s72 = sphi 0, %s72
      %s74 = sphi 0, %s72
      %s75 = sphi 0, %s74
      %s89 = sphi 0, %s75
      %s93 = sphi 0, %s93
      %s95 = sphi 0, %s93
      %s96 = sphi 0, %s95
      %s110 = sphi 0, %s96
      %s114 = sphi 0, %s114
      %s116 = sphi 0, %s114
      %s117 = sphi 0, %s116
      %s131 = sphi 0, %s117
      %s137 = sphi 0, %s139
      %s140 = sphi 0, %s137
      %s141 = sphi 0, %s140
      %s157 = sphi 0, %s141
    $region4: #{tpu_custom_call.1} parent=1 // loop_header_branch
      %20 = sbr.rel (%p18) target = $region8
    $region5: #{tpu_custom_call.1} parent=1 // loop_body
      %s22 = ssub.s32 %s17, 1
      %s23 = ssub.s32 %s17, 2
      %s24 = sadd.s32 %s17, 1
      %s25 = ssub.s32 %s17, %s24
      %p26 = scmp.eq.s32.totalorder %s25, 0
      %s28 = sadd.s32 %s27, 1
      %s29 = scalar_select %p26, %s27, %s28
      %p32 = pneg %p26
      %p33 = scmp.eq.s32.totalorder %s17, 1
      %p34 = por %p32, %p33
      %p35 = scmp.ne.s32.totalorder %s27, %s30
      %p36 = scmp.eq.s32.totalorder %s17, 0
      %p37 = por %p35, %p36
      %p38 = scmp.ne.s32.totalorder %s27, %s30
      %p39 = scmp.eq.s32.totalorder %s22, 1
      %p40 = por %p38, %p39
      %p41 = scmp.ne.s32.totalorder %s30, %s31
      %p42 = scmp.eq.s32.totalorder %s22, 0
      %p43 = por %p41, %p42
      %p44 = scmp.ne.s32.totalorder %s30, %s31
      %p45 = scmp.eq.s32.totalorder %s23, 1
      %p46 = por %p44, %p45
      %p48 = scmp.ne.s32.totalorder %s31, %s47
      %p49 = scmp.eq.s32.totalorder %s23, 0
      %p50 = por %p48, %p49
      %s52 = sadd.s32 %s51, 1
      %p55 = scmp.eq.s32.totalorder %s17, 1
      %p56 = scmp.ne.s32.totalorder %s51, %s53
      %p57 = scmp.eq.s32.totalorder %s17, 0
      %p58 = por %p56, %p57
      %p59 = scmp.ne.s32.totalorder %s51, %s53
      %p60 = scmp.eq.s32.totalorder %s22, 1
      %p61 = por %p59, %p60
      %p62 = scmp.ne.s32.totalorder %s53, %s54
      %p63 = scmp.eq.s32.totalorder %s22, 0
      %p64 = por %p62, %p63
      %p65 = scmp.ne.s32.totalorder %s53, %s54
      %p66 = scmp.eq.s32.totalorder %s23, 1
      %p67 = por %p65, %p66
      %p69 = scmp.ne.s32.totalorder %s54, %s68
      %p70 = scmp.eq.s32.totalorder %s23, 0
      %p71 = por %p69, %p70
      %s73 = sadd.s32 %s72, 1
      %p76 = scmp.eq.s32.totalorder %s17, 1
      %p77 = scmp.ne.s32.totalorder %s72, %s74
      %p78 = scmp.eq.s32.totalorder %s17, 0
      %p79 = por %p77, %p78
      %p80 = scmp.ne.s32.totalorder %s72, %s74
      %p81 = scmp.eq.s32.totalorder %s22, 1
      %p82 = por %p80, %p81
      %p83 = scmp.ne.s32.totalorder %s74, %s75
      %p84 = scmp.eq.s32.totalorder %s22, 0
      %p85 = por %p83, %p84
      %p86 = scmp.ne.s32.totalorder %s74, %s75
      %p87 = scmp.eq.s32.totalorder %s23, 1
      %p88 = por %p86, %p87
      %p90 = scmp.ne.s32.totalorder %s75, %s89
      %p91 = scmp.eq.s32.totalorder %s23, 0
      %p92 = por %p90, %p91
      %s94 = sadd.s32 %s93, 1
      %p97 = scmp.eq.s32.totalorder %s17, 1
      %p98 = scmp.ne.s32.totalorder %s93, %s95
      %p99 = scmp.eq.s32.totalorder %s17, 0
      %p100 = por %p98, %p99
      %p101 = scmp.ne.s32.totalorder %s93, %s95
      %p102 = scmp.eq.s32.totalorder %s22, 1
      %p103 = por %p101, %p102
      %p104 = scmp.ne.s32.totalorder %s95, %s96
      %p105 = scmp.eq.s32.totalorder %s22, 0
      %p106 = por %p104, %p105
      %p107 = scmp.ne.s32.totalorder %s95, %s96
      %p108 = scmp.eq.s32.totalorder %s23, 1
      %p109 = por %p107, %p108
      %p111 = scmp.ne.s32.totalorder %s96, %s110
      %p112 = scmp.eq.s32.totalorder %s23, 0
      %p113 = por %p111, %p112
      %s115 = sadd.s32 %s114, 1
      %p118 = scmp.eq.s32.totalorder %s17, 1
      %p119 = scmp.ne.s32.totalorder %s114, %s116
      %p120 = scmp.eq.s32.totalorder %s17, 0
      %p121 = por %p119, %p120
      %p122 = scmp.ne.s32.totalorder %s114, %s116
      %p123 = scmp.eq.s32.totalorder %s22, 1
      %p124 = por %p122, %p123
      %p125 = scmp.ne.s32.totalorder %s116, %s117
      %p126 = scmp.eq.s32.totalorder %s22, 0
      %p127 = por %p125, %p126
      %p128 = scmp.ne.s32.totalorder %s116, %s117
      %p129 = scmp.eq.s32.totalorder %s23, 1
      %p130 = por %p128, %p129
      %p132 = scmp.ne.s32.totalorder %s117, %s131
      %p133 = scmp.eq.s32.totalorder %s23, 0
      %p134 = por %p132, %p133
      %s135 = ssub.s32 %s17, %s24
      %p136 = scmp.eq.s32.totalorder %s135, 0
      %s138 = sadd.s32 %s137, 1
      %s139 = scalar_select %p136, %s137, %s138
      %p142 = pneg %p136
      %p143 = scmp.eq.s32.totalorder %s17, 1
      %p144 = por %p142, %p143
      %p145 = scmp.ne.s32.totalorder %s137, %s140
      %p146 = scmp.eq.s32.totalorder %s17, 0
      %p147 = por %p145, %p146
      %p148 = scmp.ne.s32.totalorder %s137, %s140
      %p149 = scmp.eq.s32.totalorder %s22, 1
      %p150 = por %p148, %p149
      %p151 = scmp.ne.s32.totalorder %s140, %s141
      %p152 = scmp.eq.s32.totalorder %s22, 0
      %p153 = por %p151, %p152
      %p154 = scmp.ne.s32.totalorder %s140, %s141
      %p155 = scmp.eq.s32.totalorder %s23, 1
      %p156 = por %p154, %p155
      %p158 = scmp.ne.s32.totalorder %s141, %s157
      %p159 = scmp.eq.s32.totalorder %s23, 0
      %p160 = por %p158, %p159
      %p161 = scmp.le.s32.totalorder 1, %s17
      %p162 = scmp.lt.s32.totalorder %s17, 3
      %p163 = pnand %p161, %p162
      %p164 = pneg %p163
      // Predicated region
      $region9: #{tpu_custom_call.1} parent=5 // pred_check
        _
      $region10: #{tpu_custom_call.1} parent=5 // pred_check_branch
        %166 = sbr.rel (%p163) target = $region12
      $region11: #{tpu_custom_call.1} parent=5 // pred_region
        %s167 = ssub.s32 %s17, 1
        // Predicated region
        $region13: #{tpu_custom_call.1} parent=11 // pred_check
          %p168 = pneg %p64
        $region14: #{tpu_custom_call.1} parent=11 // pred_check_branch
          %170 = sbr.rel (%p168) target = $region16
        $region15: #{tpu_custom_call.1} parent=11 // pred_region
          _
        $region16: #{tpu_custom_call.1} parent=11 // pred_fallthru
          _
        // Predicated region
        $region17: #{tpu_custom_call.1} parent=11 // pred_check
          %p171 = pneg %p85
        $region18: #{tpu_custom_call.1} parent=11 // pred_check_branch
          %173 = sbr.rel (%p171) target = $region20
        $region19: #{tpu_custom_call.1} parent=11 // pred_region
          _
        $region20: #{tpu_custom_call.1} parent=11 // pred_fallthru
          _
        // Predicated region
        $region21: #{tpu_custom_call.1} parent=11 // pred_check
          %p174 = pneg %p106
        $region22: #{tpu_custom_call.1} parent=11 // pred_check_branch
          %176 = sbr.rel (%p174) target = $region24
        $region23: #{tpu_custom_call.1} parent=11 // pred_region
          _
        $region24: #{tpu_custom_call.1} parent=11 // pred_fallthru
          _
        // Predicated region
        $region25: #{tpu_custom_call.1} parent=11 // pred_check
          %p177 = pneg %p127
        $region26: #{tpu_custom_call.1} parent=11 // pred_check_branch
          %179 = sbr.rel (%p177) target = $region28
        $region27: #{tpu_custom_call.1} parent=11 // pred_region
          _
        $region28: #{tpu_custom_call.1} parent=11 // pred_fallthru
          _
      $region12: #{tpu_custom_call.1} parent=5 // pred_fallthru
        _
      %p180 = scmp.lt.s32.totalorder %s17, 2
      // Predicated region
      $region29: #{tpu_custom_call.1} parent=5 // pred_check
        %p181 = pneg %p180
      $region30: #{tpu_custom_call.1} parent=5 // pred_check_branch
        %183 = sbr.rel (%p181) target = $region32
      $region31: #{tpu_custom_call.1} parent=5 // pred_region
        // Predicated region
        $region33: #{tpu_custom_call.1} parent=31 // pred_check
          %p184 = pneg %p37
        $region34: #{tpu_custom_call.1} parent=31 // pred_check_branch
          %186 = sbr.rel (%p184) target = $region36
        $region35: #{tpu_custom_call.1} parent=31 // pred_region
          %s187 = sand.u32 %s27, 1
          %s188 = scalar_lea.sflag [#allocation3], %s187
          %s189 = sand.u32 %s27, 1
          %s190 = smul.addr %s189, 16
          %s191 = scalar_lea.vmem [#allocation2], %s190
          %s193 = ssub.s32 256, 256
          %194 = vsyncadd %s188, %s193
          %s195 = smul.addr %s17, 2
          %s196 = smul.addr %s195, 128
          %s197 = scalar_lea.hbm %s0, %s196
          %s199 = sshll.u32 %s191, 4
          %s200 = int_to_ptr.vmem [resolvable:$true] %s199
          %202 = dma.hbm_to_vmem [thread:$0]  %s197, 256, %s200, %s188
        $region36: #{tpu_custom_call.1} parent=31 // pred_fallthru
          _
      $region32: #{tpu_custom_call.1} parent=5 // pred_fallthru
        _
      %p203 = scmp.le.s32.totalorder 1, %s17
      %p204 = scmp.lt.s32.totalorder %s17, 3
      %p205 = pnand %p203, %p204
      %p206 = pneg %p205
      // Predicated region
      $region37: #{tpu_custom_call.1} parent=5 // pred_check
        _
      $region38: #{tpu_custom_call.1} parent=5 // pred_check_branch
        %208 = sbr.rel (%p205) target = $region40
      $region39: #{tpu_custom_call.1} parent=5 // pred_region
        %s209 = ssub.s32 %s17, 1
        %s210 = sand.u32 %s30, 1
        %s211 = scalar_lea.sflag [#allocation3], %s210
        %s212 = sand.u32 %s30, 1
        %s213 = smul.addr %s212, 16
        %s214 = scalar_lea.vmem [#allocation2], %s213
        // Predicated region
        $region41: #{tpu_custom_call.1} parent=39 // pred_check
          %p215 = pneg %p43
        $region42: #{tpu_custom_call.1} parent=39 // pred_check_branch
          %217 = sbr.rel (%p215) target = $region44
        $region43: #{tpu_custom_call.1} parent=39 // pred_region
          %218 = dma.done %s211, 256
        $region44: #{tpu_custom_call.1} parent=39 // pred_fallthru
          _
        %s219 = sand.u32 %s30, 1
        %s220 = scalar_lea.sflag [#allocation3], %s219
        %s221 = sand.u32 %s30, 1
        %s222 = smul.addr %s221, 16
        %s223 = scalar_lea.vmem [#allocation2], %s222
        %p224 = pneg %p43
        %p225 = pneg %p40
        %p226 = pneg %p64
        %p227 = pneg %p61
        %p228 = pneg %p85
        %p229 = pneg %p82
        %p230 = pneg %p106
        %p231 = pneg %p103
        %p232 = pneg %p127
        %p233 = pneg %p124
        %p234 = pneg %p153
        %p235 = pneg %p150
        %s236 = sand.u32 %s140, 1
        %s237 = scalar_lea.sflag [#allocation4], %s236
        %s238 = sand.u32 %s140, 1
        %s239 = smul.addr %s238, 16
        %s240 = scalar_lea.vmem [#allocation5], %s239
        %v241 = vld [vmem:[%s214] sm:$0xff]
        %v242 = vld [vmem:[%s214 + $0x8] sm:$0xff]
        %v243 = vadd.f32 %v241, %v242
        %244 = vadd.xlane.f32.xlu0 %v243
        %v245 = vpop.xlane.xlu0 %244
        %v246 = vmul.f32 %v245, 0.00390625
        %v247 = vld [vmem:[%s1] sm:$0xff]
        %v248 = vld [vmem:[%s2] sm:$0x1]
        %v249 = vld [vmem:[%s3] sm:$0x3]
        %v250 = vld [vmem:[%s4] sm:$0x1]
        %v252 = vlaneseq
        %v253 = vand.u32 %v252, 127
        %v254 = vlaneseq
        %v255 = vshrl.u32 %v254, 7
        %v256 = vsub.s32 %v253, %v255
        %v257 = vrot.slane %v246, %v256
        %vm258 = vcmask 64512
        %v259 = vsel %vm258, %v257, 0
        %261 = vmatprep.subr.mxu0 0.0
        %262 = vmatpush1.msra.mxu0 0.0
        %263 = vmatprep.subr.mxu0 0.0
        %264 = vmatpush1.msra.mxu0 0.0
        %265 = vmatprep.subr.mxu0 0.0
        %266 = vmatpush1.msra.mxu0 0.0
        %267 = vmatprep.subr.mxu0 0.0
        %268 = vmatpush1.msra.mxu0 0.0
        %269 = vmatprep.subr.mxu0 0.0
        %270 = vmatpush1.msra.mxu0 0.0
        %271 = vmatprep.subr.mxu0 0.0
        %272 = vmatpush1.msra.mxu0 0.0
        %273 = vmatprep.subr.mxu0 0.0
        %274 = vmatpush1.msra.mxu0 0.0
        %275 = vmatprep.subr.mxu0 0.0
        %276 = vmatpush1.msra.mxu0 0.0
        %277 = vmatprep.subr.mxu0 0.0
        %278 = vmatpush1.msra.mxu0 0.0
        %279 = vmatprep.subr.mxu0 0.0
        %280 = vmatpush1.msra.mxu0 0.0
        %281 = vmatprep.subr.mxu0 0.0
        %282 = vmatpush1.msra.mxu0 0.0
        %283 = vmatprep.subr.mxu0 0.0
        %284 = vmatpush1.msra.mxu0 0.0
        %285 = vmatprep.subr.mxu0 0.0
        %286 = vmatpush1.msra.mxu0 0.0
        %287 = vmatprep.subr.mxu0 0.0
        %288 = vmatpush1.msra.mxu0 0.0
        %289 = vmatprep.subr.mxu0 0.0
        %290 = vmatpush1.msra.mxu0 0.0
        %291 = vmatprep.subr.mxu0 0.0
        %v292 = vand.u32 %v247, 4294901760
        %293 = vmatpush1.msra.mxu0 %v292
        %294 = vmatprep.subr.mxu0 0.0
        %295 = vmatpush2.msra.mxu0 0.0
        %296 = vmatprep.subr.mxu0 0.0
        %297 = vmatpush2.msra.mxu0 0.0
        %298 = vmatprep.subr.mxu0 0.0
        %299 = vmatpush2.msra.mxu0 0.0
        %300 = vmatprep.subr.mxu0 0.0
        %301 = vmatpush2.msra.mxu0 0.0
        %302 = vmatprep.subr.mxu0 0.0
        %303 = vmatpush2.msra.mxu0 0.0
        %304 = vmatprep.subr.mxu0 0.0
        %305 = vmatpush2.msra.mxu0 0.0
        %306 = vmatprep.subr.mxu0 0.0
        %307 = vmatpush2.msra.mxu0 0.0
        %308 = vmatprep.subr.mxu0 0.0
        %309 = vmatpush2.msra.mxu0 0.0
        %310 = vmatprep.subr.mxu0 0.0
        %311 = vmatpush2.msra.mxu0 0.0
        %312 = vmatprep.subr.mxu0 0.0
        %313 = vmatpush2.msra.mxu0 0.0
        %314 = vmatprep.subr.mxu0 0.0
        %315 = vmatpush2.msra.mxu0 0.0
        %316 = vmatprep.subr.mxu0 0.0
        %317 = vmatpush2.msra.mxu0 0.0
        %318 = vmatprep.subr.mxu0 0.0
        %319 = vmatpush2.msra.mxu0 0.0
        %320 = vmatprep.subr.mxu0 0.0
        %321 = vmatpush2.msra.mxu0 0.0
        %322 = vmatprep.subr.mxu0 0.0
        %323 = vmatpush2.msra.mxu0 0.0
        %324 = vmatprep.subr.mxu0 0.0
        %325 = vmatpush2.msra.mxu0 0.0
        %326 = vmatprep.mubr.f32.mxu0 0.0
        %v327 = vand.u32 %v259, 4294901760
        %v328 = vsub.f32 %v259, %v327
        %v329 = vand.u32 %v328, 4294901760
        %v330 = vsub.f32 %v328, %v329
        %v331 = vand.u32 %v330, 4294901760
        %332 = vmatmul.mubr.f32.gmra.mxu0 %v331
        %v333 = vpop.f32.mrf.mxu0
        %v334 = vadd.f32 %v248, %v333
        %v335 = vpop.f32.mrf.mxu0
        %336 = vdwg.mxu0
        %337 = vmatprep.subr.mxu0 0.0
        %338 = vmatpush1.msra.mxu0 0.0
        %339 = vmatprep.subr.mxu0 0.0
        %340 = vmatpush1.msra.mxu0 0.0
        %341 = vmatprep.subr.mxu0 0.0
        %342 = vmatpush1.msra.mxu0 0.0
        %343 = vmatprep.subr.mxu0 0.0
        %344 = vmatpush1.msra.mxu0 0.0
        %345 = vmatprep.subr.mxu0 0.0
        %346 = vmatpush1.msra.mxu0 0.0
        %347 = vmatprep.subr.mxu0 0.0
        %348 = vmatpush1.msra.mxu0 0.0
        %349 = vmatprep.subr.mxu0 0.0
        %350 = vmatpush1.msra.mxu0 0.0
        %351 = vmatprep.subr.mxu0 0.0
        %352 = vmatpush1.msra.mxu0 0.0
        %353 = vmatprep.subr.mxu0 0.0
        %354 = vmatpush1.msra.mxu0 0.0
        %355 = vmatprep.subr.mxu0 0.0
        %356 = vmatpush1.msra.mxu0 0.0
        %357 = vmatprep.subr.mxu0 0.0
        %358 = vmatpush1.msra.mxu0 0.0
        %359 = vmatprep.subr.mxu0 0.0
        %360 = vmatpush1.msra.mxu0 0.0
        %361 = vmatprep.subr.mxu0 0.0
        %362 = vmatpush1.msra.mxu0 0.0
        %363 = vmatprep.subr.mxu0 0.0
        %364 = vmatpush1.msra.mxu0 0.0
        %365 = vmatprep.subr.mxu0 0.0
        %366 = vmatpush1.msra.mxu0 0.0
        %367 = vmatprep.subr.mxu0 0.0
        %v368 = vand.u32 %v247, 4294901760
        %v369 = vsub.f32 %v247, %v368
        %v370 = vand.u32 %v369, 4294901760
        %v371 = vsub.f32 %v369, %v370
        %v372 = vand.u32 %v371, 4294901760
        %373 = vmatpush1.msra.mxu0 %v372
        %374 = vmatprep.subr.mxu0 0.0
        %375 = vmatpush2.msra.mxu0 0.0
        %376 = vmatprep.subr.mxu0 0.0
        %377 = vmatpush2.msra.mxu0 0.0
        %378 = vmatprep.subr.mxu0 0.0
        %379 = vmatpush2.msra.mxu0 0.0
        %380 = vmatprep.subr.mxu0 0.0
        %381 = vmatpush2.msra.mxu0 0.0
        %382 = vmatprep.subr.mxu0 0.0
        %383 = vmatpush2.msra.mxu0 0.0
        %384 = vmatprep.subr.mxu0 0.0
        %385 = vmatpush2.msra.mxu0 0.0
        %386 = vmatprep.subr.mxu0 0.0
        %387 = vmatpush2.msra.mxu0 0.0
        %388 = vmatprep.subr.mxu0 0.0
        %389 = vmatpush2.msra.mxu0 0.0
        %390 = vmatprep.subr.mxu0 0.0
        %391 = vmatpush2.msra.mxu0 0.0
        %392 = vmatprep.subr.mxu0 0.0
        %393 = vmatpush2.msra.mxu0 0.0
        %394 = vmatprep.subr.mxu0 0.0
        %395 = vmatpush2.msra.mxu0 0.0
        %396 = vmatprep.subr.mxu0 0.0
        %397 = vmatpush2.msra.mxu0 0.0
        %398 = vmatprep.subr.mxu0 0.0
        %399 = vmatpush2.msra.mxu0 0.0
        %400 = vmatprep.subr.mxu0 0.0
        %401 = vmatpush2.msra.mxu0 0.0
        %402 = vmatprep.subr.mxu0 0.0
        %403 = vmatpush2.msra.mxu0 0.0
        %404 = vmatprep.subr.mxu0 0.0
        %405 = vmatpush2.msra.mxu0 0.0
        %406 = vmatprep.mubr.f32.mxu0 0.0
        %v407 = vand.u32 %v259, 4294901760
        %408 = vmatmul.mubr.f32.gmra.mxu0 %v407
        %v409 = vpop.f32.mrf.mxu0
        %v410 = vadd.f32 %v334, %v409
        %v411 = vpop.f32.mrf.mxu0
        %412 = vdwg.mxu0
        %413 = vmatprep.subr.mxu0 0.0
        %414 = vmatpush1.msra.mxu0 0.0
        %415 = vmatprep.subr.mxu0 0.0
        %416 = vmatpush1.msra.mxu0 0.0
        %417 = vmatprep.subr.mxu0 0.0
        %418 = vmatpush1.msra.mxu0 0.0
        %419 = vmatprep.subr.mxu0 0.0
        %420 = vmatpush1.msra.mxu0 0.0
        %421 = vmatprep.subr.mxu0 0.0
        %422 = vmatpush1.msra.mxu0 0.0
        %423 = vmatprep.subr.mxu0 0.0
        %424 = vmatpush1.msra.mxu0 0.0
        %425 = vmatprep.subr.mxu0 0.0
        %426 = vmatpush1.msra.mxu0 0.0
        %427 = vmatprep.subr.mxu0 0.0
        %428 = vmatpush1.msra.mxu0 0.0
        %429 = vmatprep.subr.mxu0 0.0
        %430 = vmatpush1.msra.mxu0 0.0
        %431 = vmatprep.subr.mxu0 0.0
        %432 = vmatpush1.msra.mxu0 0.0
        %433 = vmatprep.subr.mxu0 0.0
        %434 = vmatpush1.msra.mxu0 0.0
        %435 = vmatprep.subr.mxu0 0.0
        %436 = vmatpush1.msra.mxu0 0.0
        %437 = vmatprep.subr.mxu0 0.0
        %438 = vmatpush1.msra.mxu0 0.0
        %439 = vmatprep.subr.mxu0 0.0
        %440 = vmatpush1.msra.mxu0 0.0
        %441 = vmatprep.subr.mxu0 0.0
        %442 = vmatpush1.msra.mxu0 0.0
        %443 = vmatprep.subr.mxu0 0.0
        %v444 = vand.u32 %v247, 4294901760
        %v445 = vsub.f32 %v247, %v444
        %446 = vmatpush1.msra.mxu0 %v445
        %447 = vmatprep.subr.mxu0 0.0
        %448 = vmatpush2.msra.mxu0 0.0
        %449 = vmatprep.subr.mxu0 0.0
        %450 = vmatpush2.msra.mxu0 0.0
        %451 = vmatprep.subr.mxu0 0.0
        %452 = vmatpush2.msra.mxu0 0.0
        %453 = vmatprep.subr.mxu0 0.0
        %454 = vmatpush2.msra.mxu0 0.0
        %455 = vmatprep.subr.mxu0 0.0
        %456 = vmatpush2.msra.mxu0 0.0
        %457 = vmatprep.subr.mxu0 0.0
        %458 = vmatpush2.msra.mxu0 0.0
        %459 = vmatprep.subr.mxu0 0.0
        %460 = vmatpush2.msra.mxu0 0.0
        %461 = vmatprep.subr.mxu0 0.0
        %462 = vmatpush2.msra.mxu0 0.0
        %463 = vmatprep.subr.mxu0 0.0
        %464 = vmatpush2.msra.mxu0 0.0
        %465 = vmatprep.subr.mxu0 0.0
        %466 = vmatpush2.msra.mxu0 0.0
        %467 = vmatprep.subr.mxu0 0.0
        %468 = vmatpush2.msra.mxu0 0.0
        %469 = vmatprep.subr.mxu0 0.0
        %470 = vmatpush2.msra.mxu0 0.0
        %471 = vmatprep.subr.mxu0 0.0
        %472 = vmatpush2.msra.mxu0 0.0
        %473 = vmatprep.subr.mxu0 0.0
        %474 = vmatpush2.msra.mxu0 0.0
        %475 = vmatprep.subr.mxu0 0.0
        %476 = vmatpush2.msra.mxu0 0.0
        %477 = vmatprep.subr.mxu0 0.0
        %478 = vmatpush2.msra.mxu0 0.0
        %479 = vmatprep.mubr.f32.mxu0 0.0
        %v480 = vand.u32 %v259, 4294901760
        %v481 = vsub.f32 %v259, %v480
        %482 = vmatmul.mubr.f32.gmra.mxu0 %v481
        %v483 = vpop.f32.mrf.mxu0
        %v484 = vadd.f32 %v410, %v483
        %v485 = vpop.f32.mrf.mxu0
        %486 = vdwg.mxu0
        %487 = vmatprep.subr.mxu0 0.0
        %488 = vmatpush1.msra.mxu0 0.0
        %489 = vmatprep.subr.mxu0 0.0
        %490 = vmatpush1.msra.mxu0 0.0
        %491 = vmatprep.subr.mxu0 0.0
        %492 = vmatpush1.msra.mxu0 0.0
        %493 = vmatprep.subr.mxu0 0.0
        %494 = vmatpush1.msra.mxu0 0.0
        %495 = vmatprep.subr.mxu0 0.0
        %496 = vmatpush1.msra.mxu0 0.0
        %497 = vmatprep.subr.mxu0 0.0
        %498 = vmatpush1.msra.mxu0 0.0
        %499 = vmatprep.subr.mxu0 0.0
        %500 = vmatpush1.msra.mxu0 0.0
        %501 = vmatprep.subr.mxu0 0.0
        %502 = vmatpush1.msra.mxu0 0.0
        %503 = vmatprep.subr.mxu0 0.0
        %504 = vmatpush1.msra.mxu0 0.0
        %505 = vmatprep.subr.mxu0 0.0
        %506 = vmatpush1.msra.mxu0 0.0
        %507 = vmatprep.subr.mxu0 0.0
        %508 = vmatpush1.msra.mxu0 0.0
        %509 = vmatprep.subr.mxu0 0.0
        %510 = vmatpush1.msra.mxu0 0.0
        %511 = vmatprep.subr.mxu0 0.0
        %512 = vmatpush1.msra.mxu0 0.0
        %513 = vmatprep.subr.mxu0 0.0
        %514 = vmatpush1.msra.mxu0 0.0
        %515 = vmatprep.subr.mxu0 0.0
        %516 = vmatpush1.msra.mxu0 0.0
        %517 = vmatprep.subr.mxu0 0.0
        %v518 = vand.u32 %v247, 4294901760
        %519 = vmatpush1.msra.mxu0 %v518
        %520 = vmatprep.subr.mxu0 0.0
        %521 = vmatpush2.msra.mxu0 0.0
        %522 = vmatprep.subr.mxu0 0.0
        %523 = vmatpush2.msra.mxu0 0.0
        %524 = vmatprep.subr.mxu0 0.0
        %525 = vmatpush2.msra.mxu0 0.0
        %526 = vmatprep.subr.mxu0 0.0
        %527 = vmatpush2.msra.mxu0 0.0
        %528 = vmatprep.subr.mxu0 0.0
        %529 = vmatpush2.msra.mxu0 0.0
        %530 = vmatprep.subr.mxu0 0.0
        %531 = vmatpush2.msra.mxu0 0.0
        %532 = vmatprep.subr.mxu0 0.0
        %533 = vmatpush2.msra.mxu0 0.0
        %534 = vmatprep.subr.mxu0 0.0
        %535 = vmatpush2.msra.mxu0 0.0
        %536 = vmatprep.subr.mxu0 0.0
        %537 = vmatpush2.msra.mxu0 0.0
        %538 = vmatprep.subr.mxu0 0.0
        %539 = vmatpush2.msra.mxu0 0.0
        %540 = vmatprep.subr.mxu0 0.0
        %541 = vmatpush2.msra.mxu0 0.0
        %542 = vmatprep.subr.mxu0 0.0
        %543 = vmatpush2.msra.mxu0 0.0
        %544 = vmatprep.subr.mxu0 0.0
        %545 = vmatpush2.msra.mxu0 0.0
        %546 = vmatprep.subr.mxu0 0.0
        %547 = vmatpush2.msra.mxu0 0.0
        %548 = vmatprep.subr.mxu0 0.0
        %549 = vmatpush2.msra.mxu0 0.0
        %550 = vmatprep.subr.mxu0 0.0
        %551 = vmatpush2.msra.mxu0 0.0
        %552 = vmatprep.mubr.f32.mxu0 0.0
        %v553 = vand.u32 %v259, 4294901760
        %v554 = vsub.f32 %v259, %v553
        %v555 = vand.u32 %v554, 4294901760
        %556 = vmatmul.mubr.f32.gmra.mxu0 %v555
        %v557 = vpop.f32.mrf.mxu0
        %v558 = vadd.f32 %v484, %v557
        %v559 = vpop.f32.mrf.mxu0
        %560 = vdwg.mxu0
        %561 = vmatprep.subr.mxu0 0.0
        %562 = vmatpush1.msra.mxu0 0.0
        %563 = vmatprep.subr.mxu0 0.0
        %564 = vmatpush1.msra.mxu0 0.0
        %565 = vmatprep.subr.mxu0 0.0
        %566 = vmatpush1.msra.mxu0 0.0
        %567 = vmatprep.subr.mxu0 0.0
        %568 = vmatpush1.msra.mxu0 0.0
        %569 = vmatprep.subr.mxu0 0.0
        %570 = vmatpush1.msra.mxu0 0.0
        %571 = vmatprep.subr.mxu0 0.0
        %572 = vmatpush1.msra.mxu0 0.0
        %573 = vmatprep.subr.mxu0 0.0
        %574 = vmatpush1.msra.mxu0 0.0
        %575 = vmatprep.subr.mxu0 0.0
        %576 = vmatpush1.msra.mxu0 0.0
        %577 = vmatprep.subr.mxu0 0.0
        %578 = vmatpush1.msra.mxu0 0.0
        %579 = vmatprep.subr.mxu0 0.0
        %580 = vmatpush1.msra.mxu0 0.0
        %581 = vmatprep.subr.mxu0 0.0
        %582 = vmatpush1.msra.mxu0 0.0
        %583 = vmatprep.subr.mxu0 0.0
        %584 = vmatpush1.msra.mxu0 0.0
        %585 = vmatprep.subr.mxu0 0.0
        %586 = vmatpush1.msra.mxu0 0.0
        %587 = vmatprep.subr.mxu0 0.0
        %588 = vmatpush1.msra.mxu0 0.0
        %589 = vmatprep.subr.mxu0 0.0
        %590 = vmatpush1.msra.mxu0 0.0
        %591 = vmatprep.subr.mxu0 0.0
        %v592 = vand.u32 %v247, 4294901760
        %v593 = vsub.f32 %v247, %v592
        %v594 = vand.u32 %v593, 4294901760
        %595 = vmatpush1.msra.mxu0 %v594
        %596 = vmatprep.subr.mxu0 0.0
        %597 = vmatpush2.msra.mxu0 0.0
        %598 = vmatprep.subr.mxu0 0.0
        %599 = vmatpush2.msra.mxu0 0.0
        %600 = vmatprep.subr.mxu0 0.0
        %601 = vmatpush2.msra.mxu0 0.0
        %602 = vmatprep.subr.mxu0 0.0
        %603 = vmatpush2.msra.mxu0 0.0
        %604 = vmatprep.subr.mxu0 0.0
        %605 = vmatpush2.msra.mxu0 0.0
        %606 = vmatprep.subr.mxu0 0.0
        %607 = vmatpush2.msra.mxu0 0.0
        %608 = vmatprep.subr.mxu0 0.0
        %609 = vmatpush2.msra.mxu0 0.0
        %610 = vmatprep.subr.mxu0 0.0
        %611 = vmatpush2.msra.mxu0 0.0
        %612 = vmatprep.subr.mxu0 0.0
        %613 = vmatpush2.msra.mxu0 0.0
        %614 = vmatprep.subr.mxu0 0.0
        %615 = vmatpush2.msra.mxu0 0.0
        %616 = vmatprep.subr.mxu0 0.0
        %617 = vmatpush2.msra.mxu0 0.0
        %618 = vmatprep.subr.mxu0 0.0
        %619 = vmatpush2.msra.mxu0 0.0
        %620 = vmatprep.subr.mxu0 0.0
        %621 = vmatpush2.msra.mxu0 0.0
        %622 = vmatprep.subr.mxu0 0.0
        %623 = vmatpush2.msra.mxu0 0.0
        %624 = vmatprep.subr.mxu0 0.0
        %625 = vmatpush2.msra.mxu0 0.0
        %626 = vmatprep.subr.mxu0 0.0
        %627 = vmatpush2.msra.mxu0 0.0
        %628 = vmatprep.mubr.f32.mxu0 0.0
        %v629 = vand.u32 %v259, 4294901760
        %630 = vmatmul.mubr.f32.gmra.mxu0 %v629
        %v631 = vpop.f32.mrf.mxu0
        %v632 = vadd.f32 %v558, %v631
        %v633 = vpop.f32.mrf.mxu0
        %634 = vdwg.mxu0
        %635 = vmatprep.subr.mxu0 0.0
        %636 = vmatpush1.msra.mxu0 0.0
        %637 = vmatprep.subr.mxu0 0.0
        %638 = vmatpush1.msra.mxu0 0.0
        %639 = vmatprep.subr.mxu0 0.0
        %640 = vmatpush1.msra.mxu0 0.0
        %641 = vmatprep.subr.mxu0 0.0
        %642 = vmatpush1.msra.mxu0 0.0
        %643 = vmatprep.subr.mxu0 0.0
        %644 = vmatpush1.msra.mxu0 0.0
        %645 = vmatprep.subr.mxu0 0.0
        %646 = vmatpush1.msra.mxu0 0.0
        %647 = vmatprep.subr.mxu0 0.0
        %648 = vmatpush1.msra.mxu0 0.0
        %649 = vmatprep.subr.mxu0 0.0
        %650 = vmatpush1.msra.mxu0 0.0
        %651 = vmatprep.subr.mxu0 0.0
        %652 = vmatpush1.msra.mxu0 0.0
        %653 = vmatprep.subr.mxu0 0.0
        %654 = vmatpush1.msra.mxu0 0.0
        %655 = vmatprep.subr.mxu0 0.0
        %656 = vmatpush1.msra.mxu0 0.0
        %657 = vmatprep.subr.mxu0 0.0
        %658 = vmatpush1.msra.mxu0 0.0
        %659 = vmatprep.subr.mxu0 0.0
        %660 = vmatpush1.msra.mxu0 0.0
        %661 = vmatprep.subr.mxu0 0.0
        %662 = vmatpush1.msra.mxu0 0.0
        %663 = vmatprep.subr.mxu0 0.0
        %664 = vmatpush1.msra.mxu0 0.0
        %665 = vmatprep.subr.mxu0 0.0
        %v666 = vand.u32 %v247, 4294901760
        %667 = vmatpush1.msra.mxu0 %v666
        %668 = vmatprep.subr.mxu0 0.0
        %669 = vmatpush2.msra.mxu0 0.0
        %670 = vmatprep.subr.mxu0 0.0
        %671 = vmatpush2.msra.mxu0 0.0
        %672 = vmatprep.subr.mxu0 0.0
        %673 = vmatpush2.msra.mxu0 0.0
        %674 = vmatprep.subr.mxu0 0.0
        %675 = vmatpush2.msra.mxu0 0.0
        %676 = vmatprep.subr.mxu0 0.0
        %677 = vmatpush2.msra.mxu0 0.0
        %678 = vmatprep.subr.mxu0 0.0
        %679 = vmatpush2.msra.mxu0 0.0
        %680 = vmatprep.subr.mxu0 0.0
        %681 = vmatpush2.msra.mxu0 0.0
        %682 = vmatprep.subr.mxu0 0.0
        %683 = vmatpush2.msra.mxu0 0.0
        %684 = vmatprep.subr.mxu0 0.0
        %685 = vmatpush2.msra.mxu0 0.0
        %686 = vmatprep.subr.mxu0 0.0
        %687 = vmatpush2.msra.mxu0 0.0
        %688 = vmatprep.subr.mxu0 0.0
        %689 = vmatpush2.msra.mxu0 0.0
        %690 = vmatprep.subr.mxu0 0.0
        %691 = vmatpush2.msra.mxu0 0.0
        %692 = vmatprep.subr.mxu0 0.0
        %693 = vmatpush2.msra.mxu0 0.0
        %694 = vmatprep.subr.mxu0 0.0
        %695 = vmatpush2.msra.mxu0 0.0
        %696 = vmatprep.subr.mxu0 0.0
        %697 = vmatpush2.msra.mxu0 0.0
        %698 = vmatprep.subr.mxu0 0.0
        %699 = vmatpush2.msra.mxu0 0.0
        %700 = vmatprep.mubr.f32.mxu0 0.0
        %v701 = vand.u32 %v259, 4294901760
        %702 = vmatmul.mubr.f32.gmra.mxu0 %v701
        %v703 = vpop.f32.mrf.mxu0
        %v704 = vadd.f32 %v632, %v703
        %v705 = vpop.f32.mrf.mxu0
        %706 = vdwg.mxu0
        %v707 = vmax.f32 %v704, 0.0
        %vm708 = vcmask 15360
        %v710 = vsel %vm708, %v707, 0
        %vm712 = vcmask 1041408
        %v714 = vsel %vm712, %v249, 0
        %716 = vmatprep.subr.mxu0 0.0
        %717 = vmatpush1.msra.mxu0 0.0
        %718 = vmatprep.subr.mxu0 0.0
        %719 = vmatpush1.msra.mxu0 0.0
        %720 = vmatprep.subr.mxu0 0.0
        %721 = vmatpush1.msra.mxu0 0.0
        %722 = vmatprep.subr.mxu0 0.0
        %723 = vmatpush1.msra.mxu0 0.0
        %724 = vmatprep.subr.mxu0 0.0
        %725 = vmatpush1.msra.mxu0 0.0
        %726 = vmatprep.subr.mxu0 0.0
        %727 = vmatpush1.msra.mxu0 0.0
        %728 = vmatprep.subr.mxu0 0.0
        %729 = vmatpush1.msra.mxu0 0.0
        %730 = vmatprep.subr.mxu0 0.0
        %731 = vmatpush1.msra.mxu0 0.0
        %732 = vmatprep.subr.mxu0 0.0
        %733 = vmatpush1.msra.mxu0 0.0
        %734 = vmatprep.subr.mxu0 0.0
        %735 = vmatpush1.msra.mxu0 0.0
        %736 = vmatprep.subr.mxu0 0.0
        %737 = vmatpush1.msra.mxu0 0.0
        %738 = vmatprep.subr.mxu0 0.0
        %739 = vmatpush1.msra.mxu0 0.0
        %740 = vmatprep.subr.mxu0 0.0
        %741 = vmatpush1.msra.mxu0 0.0
        %742 = vmatprep.subr.mxu0 0.0
        %743 = vmatpush1.msra.mxu0 0.0
        %744 = vmatprep.subr.mxu0 0.0
        %745 = vmatpush1.msra.mxu0 0.0
        %746 = vmatprep.subr.mxu0 0.0
        %v747 = vand.u32 %v714, 4294901760
        %748 = vmatpush1.msra.mxu0 %v747
        %749 = vmatprep.subr.mxu0 0.0
        %750 = vmatpush2.msra.mxu0 0.0
        %751 = vmatprep.subr.mxu0 0.0
        %752 = vmatpush2.msra.mxu0 0.0
        %753 = vmatprep.subr.mxu0 0.0
        %754 = vmatpush2.msra.mxu0 0.0
        %755 = vmatprep.subr.mxu0 0.0
        %756 = vmatpush2.msra.mxu0 0.0
        %757 = vmatprep.subr.mxu0 0.0
        %758 = vmatpush2.msra.mxu0 0.0
        %759 = vmatprep.subr.mxu0 0.0
        %760 = vmatpush2.msra.mxu0 0.0
        %761 = vmatprep.subr.mxu0 0.0
        %762 = vmatpush2.msra.mxu0 0.0
        %763 = vmatprep.subr.mxu0 0.0
        %764 = vmatpush2.msra.mxu0 0.0
        %765 = vmatprep.subr.mxu0 0.0
        %766 = vmatpush2.msra.mxu0 0.0
        %767 = vmatprep.subr.mxu0 0.0
        %768 = vmatpush2.msra.mxu0 0.0
        %769 = vmatprep.subr.mxu0 0.0
        %770 = vmatpush2.msra.mxu0 0.0
        %771 = vmatprep.subr.mxu0 0.0
        %772 = vmatpush2.msra.mxu0 0.0
        %773 = vmatprep.subr.mxu0 0.0
        %774 = vmatpush2.msra.mxu0 0.0
        %775 = vmatprep.subr.mxu0 0.0
        %776 = vmatpush2.msra.mxu0 0.0
        %777 = vmatprep.subr.mxu0 0.0
        %778 = vmatpush2.msra.mxu0 0.0
        %779 = vmatprep.subr.mxu0 0.0
        %780 = vmatpush2.msra.mxu0 0.0
        %781 = vmatprep.mubr.f32.mxu0 0.0
        %v782 = vand.u32 %v710, 4294901760
        %v783 = vsub.f32 %v710, %v782
        %v784 = vand.u32 %v783, 4294901760
        %v785 = vsub.f32 %v783, %v784
        %v786 = vand.u32 %v785, 4294901760
        %787 = vmatmul.mubr.f32.gmra.mxu0 %v786
        %v788 = vpop.f32.mrf.mxu0
        %v789 = vadd.f32 %v250, %v788
        %v790 = vpop.f32.mrf.mxu0
        %791 = vdwg.mxu0
        %792 = vmatprep.subr.mxu0 0.0
        %793 = vmatpush1.msra.mxu0 0.0
        %794 = vmatprep.subr.mxu0 0.0
        %795 = vmatpush1.msra.mxu0 0.0
        %796 = vmatprep.subr.mxu0 0.0
        %797 = vmatpush1.msra.mxu0 0.0
        %798 = vmatprep.subr.mxu0 0.0
        %799 = vmatpush1.msra.mxu0 0.0
        %800 = vmatprep.subr.mxu0 0.0
        %801 = vmatpush1.msra.mxu0 0.0
        %802 = vmatprep.subr.mxu0 0.0
        %803 = vmatpush1.msra.mxu0 0.0
        %804 = vmatprep.subr.mxu0 0.0
        %805 = vmatpush1.msra.mxu0 0.0
        %806 = vmatprep.subr.mxu0 0.0
        %807 = vmatpush1.msra.mxu0 0.0
        %808 = vmatprep.subr.mxu0 0.0
        %809 = vmatpush1.msra.mxu0 0.0
        %810 = vmatprep.subr.mxu0 0.0
        %811 = vmatpush1.msra.mxu0 0.0
        %812 = vmatprep.subr.mxu0 0.0
        %813 = vmatpush1.msra.mxu0 0.0
        %814 = vmatprep.subr.mxu0 0.0
        %815 = vmatpush1.msra.mxu0 0.0
        %816 = vmatprep.subr.mxu0 0.0
        %817 = vmatpush1.msra.mxu0 0.0
        %818 = vmatprep.subr.mxu0 0.0
        %819 = vmatpush1.msra.mxu0 0.0
        %820 = vmatprep.subr.mxu0 0.0
        %821 = vmatpush1.msra.mxu0 0.0
        %822 = vmatprep.subr.mxu0 0.0
        %v823 = vand.u32 %v714, 4294901760
        %v824 = vsub.f32 %v714, %v823
        %v825 = vand.u32 %v824, 4294901760
        %v826 = vsub.f32 %v824, %v825
        %v827 = vand.u32 %v826, 4294901760
        %828 = vmatpush1.msra.mxu0 %v827
        %829 = vmatprep.subr.mxu0 0.0
        %830 = vmatpush2.msra.mxu0 0.0
        %831 = vmatprep.subr.mxu0 0.0
        %832 = vmatpush2.msra.mxu0 0.0
        %833 = vmatprep.subr.mxu0 0.0
        %834 = vmatpush2.msra.mxu0 0.0
        %835 = vmatprep.subr.mxu0 0.0
        %836 = vmatpush2.msra.mxu0 0.0
        %837 = vmatprep.subr.mxu0 0.0
        %838 = vmatpush2.msra.mxu0 0.0
        %839 = vmatprep.subr.mxu0 0.0
        %840 = vmatpush2.msra.mxu0 0.0
        %841 = vmatprep.subr.mxu0 0.0
        %842 = vmatpush2.msra.mxu0 0.0
        %843 = vmatprep.subr.mxu0 0.0
        %844 = vmatpush2.msra.mxu0 0.0
        %845 = vmatprep.subr.mxu0 0.0
        %846 = vmatpush2.msra.mxu0 0.0
        %847 = vmatprep.subr.mxu0 0.0
        %848 = vmatpush2.msra.mxu0 0.0
        %849 = vmatprep.subr.mxu0 0.0
        %850 = vmatpush2.msra.mxu0 0.0
        %851 = vmatprep.subr.mxu0 0.0
        %852 = vmatpush2.msra.mxu0 0.0
        %853 = vmatprep.subr.mxu0 0.0
        %854 = vmatpush2.msra.mxu0 0.0
        %855 = vmatprep.subr.mxu0 0.0
        %856 = vmatpush2.msra.mxu0 0.0
        %857 = vmatprep.subr.mxu0 0.0
        %858 = vmatpush2.msra.mxu0 0.0
        %859 = vmatprep.subr.mxu0 0.0
        %860 = vmatpush2.msra.mxu0 0.0
        %861 = vmatprep.mubr.f32.mxu0 0.0
        %v862 = vand.u32 %v710, 4294901760
        %863 = vmatmul.mubr.f32.gmra.mxu0 %v862
        %v864 = vpop.f32.mrf.mxu0
        %v865 = vadd.f32 %v789, %v864
        %v866 = vpop.f32.mrf.mxu0
        %867 = vdwg.mxu0
        %868 = vmatprep.subr.mxu0 0.0
        %869 = vmatpush1.msra.mxu0 0.0
        %870 = vmatprep.subr.mxu0 0.0
        %871 = vmatpush1.msra.mxu0 0.0
        %872 = vmatprep.subr.mxu0 0.0
        %873 = vmatpush1.msra.mxu0 0.0
        %874 = vmatprep.subr.mxu0 0.0
        %875 = vmatpush1.msra.mxu0 0.0
        %876 = vmatprep.subr.mxu0 0.0
        %877 = vmatpush1.msra.mxu0 0.0
        %878 = vmatprep.subr.mxu0 0.0
        %879 = vmatpush1.msra.mxu0 0.0
        %880 = vmatprep.subr.mxu0 0.0
        %881 = vmatpush1.msra.mxu0 0.0
        %882 = vmatprep.subr.mxu0 0.0
        %883 = vmatpush1.msra.mxu0 0.0
        %884 = vmatprep.subr.mxu0 0.0
        %885 = vmatpush1.msra.mxu0 0.0
        %886 = vmatprep.subr.mxu0 0.0
        %887 = vmatpush1.msra.mxu0 0.0
        %888 = vmatprep.subr.mxu0 0.0
        %889 = vmatpush1.msra.mxu0 0.0
        %890 = vmatprep.subr.mxu0 0.0
        %891 = vmatpush1.msra.mxu0 0.0
        %892 = vmatprep.subr.mxu0 0.0
        %893 = vmatpush1.msra.mxu0 0.0
        %894 = vmatprep.subr.mxu0 0.0
        %895 = vmatpush1.msra.mxu0 0.0
        %896 = vmatprep.subr.mxu0 0.0
        %897 = vmatpush1.msra.mxu0 0.0
        %898 = vmatprep.subr.mxu0 0.0
        %v899 = vand.u32 %v714, 4294901760
        %v900 = vsub.f32 %v714, %v899
        %901 = vmatpush1.msra.mxu0 %v900
        %902 = vmatprep.subr.mxu0 0.0
        %903 = vmatpush2.msra.mxu0 0.0
        %904 = vmatprep.subr.mxu0 0.0
        %905 = vmatpush2.msra.mxu0 0.0
        %906 = vmatprep.subr.mxu0 0.0
        %907 = vmatpush2.msra.mxu0 0.0
        %908 = vmatprep.subr.mxu0 0.0
        %909 = vmatpush2.msra.mxu0 0.0
        %910 = vmatprep.subr.mxu0 0.0
        %911 = vmatpush2.msra.mxu0 0.0
        %912 = vmatprep.subr.mxu0 0.0
        %913 = vmatpush2.msra.mxu0 0.0
        %914 = vmatprep.subr.mxu0 0.0
        %915 = vmatpush2.msra.mxu0 0.0
        %916 = vmatprep.subr.mxu0 0.0
        %917 = vmatpush2.msra.mxu0 0.0
        %918 = vmatprep.subr.mxu0 0.0
        %919 = vmatpush2.msra.mxu0 0.0
        %920 = vmatprep.subr.mxu0 0.0
        %921 = vmatpush2.msra.mxu0 0.0
        %922 = vmatprep.subr.mxu0 0.0
        %923 = vmatpush2.msra.mxu0 0.0
        %924 = vmatprep.subr.mxu0 0.0
        %925 = vmatpush2.msra.mxu0 0.0
        %926 = vmatprep.subr.mxu0 0.0
        %927 = vmatpush2.msra.mxu0 0.0
        %928 = vmatprep.subr.mxu0 0.0
        %929 = vmatpush2.msra.mxu0 0.0
        %930 = vmatprep.subr.mxu0 0.0
        %931 = vmatpush2.msra.mxu0 0.0
        %932 = vmatprep.subr.mxu0 0.0
        %933 = vmatpush2.msra.mxu0 0.0
        %934 = vmatprep.mubr.f32.mxu0 0.0
        %v935 = vand.u32 %v710, 4294901760
        %v936 = vsub.f32 %v710, %v935
        %937 = vmatmul.mubr.f32.gmra.mxu0 %v936
        %v938 = vpop.f32.mrf.mxu0
        %v939 = vadd.f32 %v865, %v938
        %v940 = vpop.f32.mrf.mxu0
        %941 = vdwg.mxu0
        %942 = vmatprep.subr.mxu0 0.0
        %943 = vmatpush1.msra.mxu0 0.0
        %944 = vmatprep.subr.mxu0 0.0
        %945 = vmatpush1.msra.mxu0 0.0
        %946 = vmatprep.subr.mxu0 0.0
        %947 = vmatpush1.msra.mxu0 0.0
        %948 = vmatprep.subr.mxu0 0.0
        %949 = vmatpush1.msra.mxu0 0.0
        %950 = vmatprep.subr.mxu0 0.0
        %951 = vmatpush1.msra.mxu0 0.0
        %952 = vmatprep.subr.mxu0 0.0
        %953 = vmatpush1.msra.mxu0 0.0
        %954 = vmatprep.subr.mxu0 0.0
        %955 = vmatpush1.msra.mxu0 0.0
        %956 = vmatprep.subr.mxu0 0.0
        %957 = vmatpush1.msra.mxu0 0.0
        %958 = vmatprep.subr.mxu0 0.0
        %959 = vmatpush1.msra.mxu0 0.0
        %960 = vmatprep.subr.mxu0 0.0
        %961 = vmatpush1.msra.mxu0 0.0
        %962 = vmatprep.subr.mxu0 0.0
        %963 = vmatpush1.msra.mxu0 0.0
        %964 = vmatprep.subr.mxu0 0.0
        %965 = vmatpush1.msra.mxu0 0.0
        %966 = vmatprep.subr.mxu0 0.0
        %967 = vmatpush1.msra.mxu0 0.0
        %968 = vmatprep.subr.mxu0 0.0
        %969 = vmatpush1.msra.mxu0 0.0
        %970 = vmatprep.subr.mxu0 0.0
        %971 = vmatpush1.msra.mxu0 0.0
        %972 = vmatprep.subr.mxu0 0.0
        %v973 = vand.u32 %v714, 4294901760
        %974 = vmatpush1.msra.mxu0 %v973
        %975 = vmatprep.subr.mxu0 0.0
        %976 = vmatpush2.msra.mxu0 0.0
        %977 = vmatprep.subr.mxu0 0.0
        %978 = vmatpush2.msra.mxu0 0.0
        %979 = vmatprep.subr.mxu0 0.0
        %980 = vmatpush2.msra.mxu0 0.0
        %981 = vmatprep.subr.mxu0 0.0
        %982 = vmatpush2.msra.mxu0 0.0
        %983 = vmatprep.subr.mxu0 0.0
        %984 = vmatpush2.msra.mxu0 0.0
        %985 = vmatprep.subr.mxu0 0.0
        %986 = vmatpush2.msra.mxu0 0.0
        %987 = vmatprep.subr.mxu0 0.0
        %988 = vmatpush2.msra.mxu0 0.0
        %989 = vmatprep.subr.mxu0 0.0
        %990 = vmatpush2.msra.mxu0 0.0
        %991 = vmatprep.subr.mxu0 0.0
        %992 = vmatpush2.msra.mxu0 0.0
        %993 = vmatprep.subr.mxu0 0.0
        %994 = vmatpush2.msra.mxu0 0.0
        %995 = vmatprep.subr.mxu0 0.0
        %996 = vmatpush2.msra.mxu0 0.0
        %997 = vmatprep.subr.mxu0 0.0
        %998 = vmatpush2.msra.mxu0 0.0
        %999 = vmatprep.subr.mxu0 0.0
        %1000 = vmatpush2.msra.mxu0 0.0
        %1001 = vmatprep.subr.mxu0 0.0
        %1002 = vmatpush2.msra.mxu0 0.0
        %1003 = vmatprep.subr.mxu0 0.0
        %1004 = vmatpush2.msra.mxu0 0.0
        %1005 = vmatprep.subr.mxu0 0.0
        %1006 = vmatpush2.msra.mxu0 0.0
        %1007 = vmatprep.mubr.f32.mxu0 0.0
        %v1008 = vand.u32 %v710, 4294901760
        %v1009 = vsub.f32 %v710, %v1008
        %v1010 = vand.u32 %v1009, 4294901760
        %1011 = vmatmul.mubr.f32.gmra.mxu0 %v1010
        %v1012 = vpop.f32.mrf.mxu0
        %v1013 = vadd.f32 %v939, %v1012
        %v1014 = vpop.f32.mrf.mxu0
        %1015 = vdwg.mxu0
        %1016 = vmatprep.subr.mxu0 0.0
        %1017 = vmatpush1.msra.mxu0 0.0
        %1018 = vmatprep.subr.mxu0 0.0
        %1019 = vmatpush1.msra.mxu0 0.0
        %1020 = vmatprep.subr.mxu0 0.0
        %1021 = vmatpush1.msra.mxu0 0.0
        %1022 = vmatprep.subr.mxu0 0.0
        %1023 = vmatpush1.msra.mxu0 0.0
        %1024 = vmatprep.subr.mxu0 0.0
        %1025 = vmatpush1.msra.mxu0 0.0
        %1026 = vmatprep.subr.mxu0 0.0
        %1027 = vmatpush1.msra.mxu0 0.0
        %1028 = vmatprep.subr.mxu0 0.0
        %1029 = vmatpush1.msra.mxu0 0.0
        %1030 = vmatprep.subr.mxu0 0.0
        %1031 = vmatpush1.msra.mxu0 0.0
        %1032 = vmatprep.subr.mxu0 0.0
        %1033 = vmatpush1.msra.mxu0 0.0
        %1034 = vmatprep.subr.mxu0 0.0
        %1035 = vmatpush1.msra.mxu0 0.0
        %1036 = vmatprep.subr.mxu0 0.0
        %1037 = vmatpush1.msra.mxu0 0.0
        %1038 = vmatprep.subr.mxu0 0.0
        %1039 = vmatpush1.msra.mxu0 0.0
        %1040 = vmatprep.subr.mxu0 0.0
        %1041 = vmatpush1.msra.mxu0 0.0
        %1042 = vmatprep.subr.mxu0 0.0
        %1043 = vmatpush1.msra.mxu0 0.0
        %1044 = vmatprep.subr.mxu0 0.0
        %1045 = vmatpush1.msra.mxu0 0.0
        %1046 = vmatprep.subr.mxu0 0.0
        %v1047 = vand.u32 %v714, 4294901760
        %v1048 = vsub.f32 %v714, %v1047
        %v1049 = vand.u32 %v1048, 4294901760
        %1050 = vmatpush1.msra.mxu0 %v1049
        %1051 = vmatprep.subr.mxu0 0.0
        %1052 = vmatpush2.msra.mxu0 0.0
        %1053 = vmatprep.subr.mxu0 0.0
        %1054 = vmatpush2.msra.mxu0 0.0
        %1055 = vmatprep.subr.mxu0 0.0
        %1056 = vmatpush2.msra.mxu0 0.0
        %1057 = vmatprep.subr.mxu0 0.0
        %1058 = vmatpush2.msra.mxu0 0.0
        %1059 = vmatprep.subr.mxu0 0.0
        %1060 = vmatpush2.msra.mxu0 0.0
        %1061 = vmatprep.subr.mxu0 0.0
        %1062 = vmatpush2.msra.mxu0 0.0
        %1063 = vmatprep.subr.mxu0 0.0
        %1064 = vmatpush2.msra.mxu0 0.0
        %1065 = vmatprep.subr.mxu0 0.0
        %1066 = vmatpush2.msra.mxu0 0.0
        %1067 = vmatprep.subr.mxu0 0.0
        %1068 = vmatpush2.msra.mxu0 0.0
        %1069 = vmatprep.subr.mxu0 0.0
        %1070 = vmatpush2.msra.mxu0 0.0
        %1071 = vmatprep.subr.mxu0 0.0
        %1072 = vmatpush2.msra.mxu0 0.0
        %1073 = vmatprep.subr.mxu0 0.0
        %1074 = vmatpush2.msra.mxu0 0.0
        %1075 = vmatprep.subr.mxu0 0.0
        %1076 = vmatpush2.msra.mxu0 0.0
        %1077 = vmatprep.subr.mxu0 0.0
        %1078 = vmatpush2.msra.mxu0 0.0
        %1079 = vmatprep.subr.mxu0 0.0
        %1080 = vmatpush2.msra.mxu0 0.0
        %1081 = vmatprep.subr.mxu0 0.0
        %1082 = vmatpush2.msra.mxu0 0.0
        %1083 = vmatprep.mubr.f32.mxu0 0.0
        %v1084 = vand.u32 %v710, 4294901760
        %1085 = vmatmul.mubr.f32.gmra.mxu0 %v1084
        %v1086 = vpop.f32.mrf.mxu0
        %v1087 = vadd.f32 %v1013, %v1086
        %v1088 = vpop.f32.mrf.mxu0
        %1089 = vdwg.mxu0
        %1090 = vmatprep.subr.mxu0 0.0
        %1091 = vmatpush1.msra.mxu0 0.0
        %1092 = vmatprep.subr.mxu0 0.0
        %1093 = vmatpush1.msra.mxu0 0.0
        %1094 = vmatprep.subr.mxu0 0.0
        %1095 = vmatpush1.msra.mxu0 0.0
        %1096 = vmatprep.subr.mxu0 0.0
        %1097 = vmatpush1.msra.mxu0 0.0
        %1098 = vmatprep.subr.mxu0 0.0
        %1099 = vmatpush1.msra.mxu0 0.0
        %1100 = vmatprep.subr.mxu0 0.0
        %1101 = vmatpush1.msra.mxu0 0.0
        %1102 = vmatprep.subr.mxu0 0.0
        %1103 = vmatpush1.msra.mxu0 0.0
        %1104 = vmatprep.subr.mxu0 0.0
        %1105 = vmatpush1.msra.mxu0 0.0
        %1106 = vmatprep.subr.mxu0 0.0
        %1107 = vmatpush1.msra.mxu0 0.0
        %1108 = vmatprep.subr.mxu0 0.0
        %1109 = vmatpush1.msra.mxu0 0.0
        %1110 = vmatprep.subr.mxu0 0.0
        %1111 = vmatpush1.msra.mxu0 0.0
        %1112 = vmatprep.subr.mxu0 0.0
        %1113 = vmatpush1.msra.mxu0 0.0
        %1114 = vmatprep.subr.mxu0 0.0
        %1115 = vmatpush1.msra.mxu0 0.0
        %1116 = vmatprep.subr.mxu0 0.0
        %1117 = vmatpush1.msra.mxu0 0.0
        %1118 = vmatprep.subr.mxu0 0.0
        %1119 = vmatpush1.msra.mxu0 0.0
        %1120 = vmatprep.subr.mxu0 0.0
        %v1121 = vand.u32 %v714, 4294901760
        %1122 = vmatpush1.msra.mxu0 %v1121
        %1123 = vmatprep.subr.mxu0 0.0
        %1124 = vmatpush2.msra.mxu0 0.0
        %1125 = vmatprep.subr.mxu0 0.0
        %1126 = vmatpush2.msra.mxu0 0.0
        %1127 = vmatprep.subr.mxu0 0.0
        %1128 = vmatpush2.msra.mxu0 0.0
        %1129 = vmatprep.subr.mxu0 0.0
        %1130 = vmatpush2.msra.mxu0 0.0
        %1131 = vmatprep.subr.mxu0 0.0
        %1132 = vmatpush2.msra.mxu0 0.0
        %1133 = vmatprep.subr.mxu0 0.0
        %1134 = vmatpush2.msra.mxu0 0.0
        %1135 = vmatprep.subr.mxu0 0.0
        %1136 = vmatpush2.msra.mxu0 0.0
        %1137 = vmatprep.subr.mxu0 0.0
        %1138 = vmatpush2.msra.mxu0 0.0
        %1139 = vmatprep.subr.mxu0 0.0
        %1140 = vmatpush2.msra.mxu0 0.0
        %1141 = vmatprep.subr.mxu0 0.0
        %1142 = vmatpush2.msra.mxu0 0.0
        %1143 = vmatprep.subr.mxu0 0.0
        %1144 = vmatpush2.msra.mxu0 0.0
        %1145 = vmatprep.subr.mxu0 0.0
        %1146 = vmatpush2.msra.mxu0 0.0
        %1147 = vmatprep.subr.mxu0 0.0
        %1148 = vmatpush2.msra.mxu0 0.0
        %1149 = vmatprep.subr.mxu0 0.0
        %1150 = vmatpush2.msra.mxu0 0.0
        %1151 = vmatprep.subr.mxu0 0.0
        %1152 = vmatpush2.msra.mxu0 0.0
        %1153 = vmatprep.subr.mxu0 0.0
        %1154 = vmatpush2.msra.mxu0 0.0
        %1155 = vmatprep.mubr.f32.mxu0 0.0
        %v1156 = vand.u32 %v710, 4294901760
        %1157 = vmatmul.mubr.f32.gmra.mxu0 %v1156
        %v1158 = vpop.f32.mrf.mxu0
        %v1159 = vadd.f32 %v1087, %v1158
        %v1160 = vpop.f32.mrf.mxu0
        %1161 = vdwg.mxu0
        %v1162 = vxor.u32 %v1159, 2147483648
        %v1163 = vmul.f32 %v1162, 1.442695
        %v1164 = vpow.pop %v1163
        %v1165 = vadd.f32 %v1164, 1.0
        %v1166 = vrcp.pop %v1165
        %v1167 = vmul.f32 1.0, %v1166
        %v1168 = vlaneseq
        %v1169 = vshrl.u32 %v1168, 7
        %v1170 = vsub.s32 0, %v1169
        %v1171 = vrot.slane %v1167, %v1170
        %1173 = vbcast.lane.b32.xlu0 %v1171, 256
        %v1174 = vpop.permute.xlu0 %1173
        %v1175 = vmul.f32 %v241, %v1174
        %v1176 = vmul.f32 %v242, %v1174
        %1177 = vst [vmem:[%s240] sm:$0xff] %v1175
        %1178 = vst [vmem:[%s240 + $0x8] sm:$0xff] %v1176
        %s1179 = sand.u32 %s140, 1
        %s1180 = scalar_lea.sflag [#allocation4], %s1179
        %s1181 = sand.u32 %s140, 1
        %s1182 = smul.addr %s1181, 16
        %s1183 = scalar_lea.vmem [#allocation5], %s1182
        // Predicated region
        $region45: #{tpu_custom_call.1} parent=39 // pred_check
          %p1184 = pneg %p150
        $region46: #{tpu_custom_call.1} parent=39 // pred_check_branch
          %1186 = sbr.rel (%p1184) target = $region48
        $region47: #{tpu_custom_call.1} parent=39 // pred_region
          %s1188 = ssub.s32 256, 256
          %1189 = vsyncadd %s1180, %s1188
          %s1190 = smul.addr %s22, 2
          %s1191 = smul.addr %s1190, 128
          %s1192 = scalar_lea.hbm %s5, %s1191
          %s1194 = sshll.u32 %s1183, 4
          %s1195 = int_to_ptr.vmem [resolvable:$true] %s1194
          %1197 = dma.vmem_to_hbm [thread:$0]  %s1195, 256, %s1192, %s1180
        $region48: #{tpu_custom_call.1} parent=39 // pred_fallthru
          _
      $region40: #{tpu_custom_call.1} parent=5 // pred_fallthru
        _
      %p1198 = scmp.le.s32.totalorder 2, %s17
      // Predicated region
      $region49: #{tpu_custom_call.1} parent=5 // pred_check
        %p1199 = pneg %p1198
      $region50: #{tpu_custom_call.1} parent=5 // pred_check_branch
        %1201 = sbr.rel (%p1199) target = $region52
      $region51: #{tpu_custom_call.1} parent=5 // pred_region
        %s1202 = ssub.s32 %s17, 2
        // Predicated region
        $region53: #{tpu_custom_call.1} parent=51 // pred_check
          %p1203 = pneg %p156
        $region54: #{tpu_custom_call.1} parent=51 // pred_check_branch
          %1205 = sbr.rel (%p1203) target = $region56
        $region55: #{tpu_custom_call.1} parent=51 // pred_region
          %s1206 = sand.u32 %s141, 1
          %s1207 = scalar_lea.sflag [#allocation4], %s1206
          %s1208 = sand.u32 %s141, 1
          %s1209 = smul.addr %s1208, 16
          %s1210 = scalar_lea.vmem [#allocation5], %s1209
          %1211 = dma.done %s1207, 256
        $region56: #{tpu_custom_call.1} parent=51 // pred_fallthru
          _
      $region52: #{tpu_custom_call.1} parent=5 // pred_fallthru
        _
    $region6: #{tpu_custom_call.1} parent=1 // loop_footer
      %s21 = sadd.s32 1, %s17
    $region7: #{tpu_custom_call.1} parent=1 // loop_footer_branch
      %16 = sbr.rel target = $region3
    $region8: #{tpu_custom_call.1} parent=1 // loop_exit
      _
    %1212 = vsyncpa [#allocation3], 1
    %s1213 = scalar_lea.sflag [#allocation3], 1
    %1214 = vsyncpa %s1213, 1
    %1215 = vsyncpa [#allocation4], 1
    %s1216 = scalar_lea.sflag [#allocation4], 1
    %1217 = vsyncpa %s1216, 1

</llo_original>
